<compile_context>
chip_gen: v6e
topology: v6e:2x2x1
jax: 0.10.0
libtpu: 0.0.40
codegen_flags: <defaults>
</compile_context>

<pallas_src>
import functools

import jax
import jax.numpy as jnp
from jax.experimental import pallas as pl
from jax.experimental.pallas import tpu as pltpu


def _round_up(x: int, m: int) -> int:
    return (x + m - 1) // m * m


# --------------------------- device-adaptive defaults ---------------------------

def _device_kind() -> str:
    try:
        return jax.devices()[0].device_kind.lower()
    except Exception:
        return ""


def _vmem_budget_bytes(kind: str) -> int:
    # v7x has only 64 MiB of VMEM per TensorCore -> leave headroom for Mosaic scratch.
    if "v7" in kind:
        return 56 * 1024 * 1024
    if any(g in kind for g in ("v4", "v5", "v6")):
        return 100 * 1024 * 1024          # 128 MiB physical on these chips
    return 56 * 1024 * 1024               # unknown: be conservative


def _default_tm(kind: str) -> int:
    if "v6" in kind:
        return 1024       # v6e ridge ~650 FLOP/B -> need ~1024 rows of weight reuse
    if "v7" in kind:
        return 512        # v7x ridge ~310 FLOP/B
    return 256            # v5e ridge ~240 FLOP/B -> already compute-bound at 256


def _default_tn(kind: str) -> int:
    return 256 if "v7" in kind else 512


def _choose_tn(dim_inner: int, tn_req: int) -> int:
    """Largest multiple of 128 <= tn_req that divides round_up(dim_inner, 128)
    (minimises zero-padding waste on the inner dimension)."""
    din_128 = _round_up(dim_inner, 128)
    tn_req = max(128, min(tn_req, din_128) // 128 * 128)
    for tn in range(tn_req, 127, -128):
        if din_128 % tn == 0:
            return tn
    return tn_req


def _fit_tm(tm, tn, d_p, m, cdt_bytes, out_bytes, budget, kind):
    # Never larger than the (8-aligned) token count.
    tm = min(tm, max(8, _round_up(m, 8)))
    # v7x has 2 TensorCores: keep at least 2 M-tiles when there is enough work.
    if "v7" in kind and m > 512:
        tm = min(tm, max(256, _round_up(-(-m // 2), 256)))
    tm = max(8, tm // 8 * 8)

    def est(tm_):
        x_buf = tm_ * d_p * cdt_bytes              # single-buffered x tile
        o_buf = tm_ * d_p * out_bytes              # single-buffered out tile
        acc = tm_ * d_p * 4                        # f32 accumulator scratch
        w12 = 2 * d_p * 2 * tn * cdt_bytes         # double-buffered streamed weights
        w3 = 2 * tn * d_p * cdt_bytes
        tmp = tm_ * tn * 12                        # f32 h / gated intermediates
        return x_buf + o_buf + acc + w12 + w3 + tmp

    while est(tm) > budget - 4 * 1024 * 1024 and tm > 8:
        tm = max(8, (tm // 2) // 8 * 8)
    return tm


def _maybe_buffered_spec(shape, index_map, buffer_count):
    """BlockSpec with pipeline_mode=pl.Buffered(n); falls back gracefully on old jax."""
    try:
        return pl.BlockSpec(shape, index_map, pipeline_mode=pl.Buffered(buffer_count))
    except Exception:
        return pl.BlockSpec(shape, index_map)


# ----------------------------------- kernel -----------------------------------

def _glu_kernel(x_ref, w12_ref, w3_ref, o_ref, acc_ref):
    # x_ref:   (tm, D_p)    bf16 token tile              (resident over k, single-buffered)
    # w12_ref: (D_p, 2*tn)  bf16, columns = [W1_k | W2_k] (streamed over k)
    # w3_ref:  (tn, D_p)    bf16 W3 tile                 (streamed over k)
    # o_ref:   (tm, D_p)    output tile (written once, at the last k step)
    # acc_ref: (tm, D_p)    f32 VMEM accumulator for the W3 reduction
    k = pl.program_id(1)
    tn = w3_ref.shape[0]

    # One fused MXU op for both gate and value projections of this inner tile.
    h = jnp.dot(x_ref[...], w12_ref[...], preferred_element_type=jnp.float32)
    gated = jax.nn.sigmoid(h[:, :tn]) * h[:, tn:]          # act = Sigmoid (GLUCfg default)
    part = jnp.dot(gated.astype(w3_ref.dtype), w3_ref[...],
                   preferred_element_type=jnp.float32)

    @pl.when(k == 0)
    def _():                      # first step: store directly (no zero-init + RMW)
        acc_ref[...] = part

    @pl.when(k > 0)
    def _():
        acc_ref[...] += part

    @pl.when(k == pl.num_programs(1) - 1)
    def _():
        o_ref[...] = acc_ref[...].astype(o_ref.dtype)


# --------------------------- packing (call ONCE, reuse) ---------------------------

def pack_glu_weights(w1, w2, w3, *, tn=None, compute_dtype=jnp.bfloat16):
    """One-time repacking of torch-layout GLU weights for the kernel.

    Hoists the per-call weight HBM traffic (cast/transpose/pad/concat) out of the
    forward hot path.  Returns (w12, w3t, tn).
      w1, w2: (dim_inner, dim)   torch nn.Linear layout (out, in)
      w3:     (dim, dim_inner)
    """
    din, d = w1.shape
    kind = _device_kind()
    if tn is None:
        tn = _default_tn(kind)
    tn = _choose_tn(din, tn)

    d_p = _round_up(d, 128)
    din_p = _round_up(din, tn)
    n_k = din_p // tn

    # Zero padding is mathematically exact: padded gate columns give sigmoid(0)=0.5,
    # but the matching value columns and W3 rows are zero.
    w1t = jnp.pad(w1.T.astype(compute_dtype), ((0, d_p - d), (0, din_p - din)))
    w2t = jnp.pad(w2.T.astype(compute_dtype), ((0, d_p - d), (0, din_p - din)))
    w3t = jnp.pad(w3.T.astype(compute_dtype), ((0, din_p - din), (0, d_p - d)))
    # Fuse W1/W2 per inner tile: columns of block k are [W1_k | W2_k].
    w12 = jnp.concatenate(
        [w1t.reshape(d_p, n_k, tn), w2t.reshape(d_p, n_k, tn)], axis=2
    ).reshape(d_p, 2 * din_p)
    return w12, w3t, tn


# ----------------------------------- forward -----------------------------------

@functools.partial(jax.jit, static_argnames=("tn", "tm", "out_dtype"))
def glu_forward_packed(x, w12, w3t, *, tn, tm=None, out_dtype=None):
    """GLU forward using pre-packed weights from `pack_glu_weights`.

    x: (batch, seq, dim).  Output dtype defaults to x.dtype (pass out_dtype=jnp.bfloat16
    to halve output writeback if downstream accepts it).
    """
    b, s, d = x.shape
    m = b * s
    d_p = w12.shape[0]
    din_p = w3t.shape[0]
    n_k = din_p // tn

    compute_dtype = w12.dtype
    cdt_bytes = jnp.dtype(compute_dtype).itemsize
    out_dtype = x.dtype if out_dtype is None else out_dtype
    out_bytes = jnp.dtype(out_dtype).itemsize

    kind = _device_kind()
    budget = _vmem_budget_bytes(kind)
    if tm is None:
        tm = _default_tm(kind)
    tm = _fit_tm(tm, tn, d_p, m, cdt_bytes, out_bytes, budget, kind)
    m_p = _round_up(m, tm)

    x2d = x.reshape(m, d).astype(compute_dtype)
    if (m_p, d_p) != (m, d):
        x2d = jnp.pad(x2d, ((0, m_p - m), (0, d_p - d)))

    out = pl.pallas_call(
        _glu_kernel,
        out_shape=jax.ShapeDtypeStruct((m_p, d_p), out_dtype),
        grid_spec=pltpu.PrefetchScalarGridSpec(
            num_scalar_prefetch=0,
            grid=(m_p // tm, n_k),                                 # reduction axis last
            in_specs=[
                # x tile: resident over k -> single buffer.
                _maybe_buffered_spec((tm, d_p), lambda i, k: (i, 0), 1),
                # streamed weight tiles: keep default double buffering.
                pl.BlockSpec((d_p, 2 * tn), lambda i, k: (0, k)),  # fused [W1_k | W2_k]
                pl.BlockSpec((tn, d_p), lambda i, k: (k, 0)),      # W3_k
            ],
            # output tile: written once per i -> single buffer.
            out_specs=_maybe_buffered_spec((tm, d_p), lambda i, k: (i, 0), 1),
            scratch_shapes=[pltpu.VMEM((tm, d_p), jnp.float32)],   # f32 accumulator
        ),
        compiler_params=pltpu.CompilerParams(
            dimension_semantics=("parallel", "arbitrary"),
            vmem_limit_bytes=budget,
        ),
    )(x2d, w12, w3t)

    # Strip the M / D zero padding.
    return out[:m, :d].reshape(b, s, d)


def glu_forward(x, w1, w2, w3, *, tn=None, tm=None,
                compute_dtype=jnp.bfloat16, out_dtype=None):
    """Convenience wrapper (packs weights per call).  For hot loops, call
    pack_glu_weights() once and use glu_forward_packed()."""
    w12, w3t, tn = pack_glu_weights(w1, w2, w3, tn=tn, compute_dtype=compute_dtype)
    return glu_forward_packed(x, w12, w3t, tn=tn, tm=tm, out_dtype=out_dtype)


# ----------------------------- reference & test setup -----------------------------

def make_glu_params(key, dim, multiple_of=16, init_std=0.02, dtype=jnp.float32):
    """Deterministic re-implementation of GLU.__init__ / init_weights."""
    dim_inner = int(2 * dim * 4 / 3)
    dim_inner = multiple_of * ((dim_inner + multiple_of - 1) // multiple_of)
    k1, k2, k3 = jax.random.split(key, 3)
    # torch nn.Linear weight layout: (out_features, in_features)
    w1 = (init_std * jax.random.normal(k1, (dim_inner, dim))).astype(dtype)
    w2 = (init_std * jax.random.normal(k2, (dim_inner, dim))).astype(dtype)
    w3 = (init_std * jax.random.normal(k3, (dim, dim_inner))).astype(dtype)
    return w1, w2, w3, dim_inner


def glu_reference(x, w1, w2, w3):
    """Pure-JAX f32 reference matching torch semantics (Linear: x @ W^T)."""
    h1 = x @ w1.T
    h2 = x @ w2.T
    return (jax.nn.sigmoid(h1) * h2) @ w3.T


if __name__ == "__main__":
    key = jax.random.PRNGKey(0)
    kx, kp, kx2, kp2 = jax.random.split(key, 4)

    # --- small case (module-scale example shapes) ---
    batch, seq, dim = 2, 8, 32                       # dim_inner -> 96 (padded to 128 inside)
    x = jax.random.normal(kx, (batch, seq, dim), dtype=jnp.float32)
    w1, w2, w3, _ = make_glu_params(kp, dim)
    w12, w3t, tn = pack_glu_weights(w1, w2, w3)      # one-time weight packing
    y = jax.block_until_ready(glu_forward_packed(x, w12, w3t, tn=tn))
    y_ref = glu_reference(x, w1, w2, w3)
    assert y.shape == (batch, seq, dim)
    assert jnp.allclose(y, y_ref, atol=5e-3, rtol=5e-2), "small-case mismatch"

    # --- medium case: exercises inner-dim streaming (n_k > 1) and M padding ---
    batch2, seq2, dim2 = 2, 50, 256                  # dim_inner -> 688 -> multiple k blocks
    x2 = jax.random.normal(kx2, (batch2, seq2, dim2), dtype=jnp.float32)
    w1b, w2b, w3b, _ = make_glu_params(kp2, dim2)
    w12b, w3tb, tnb = pack_glu_weights(w1b, w2b, w3b)
    y2 = jax.block_until_ready(glu_forward_packed(x2, w12b, w3tb, tn=tnb))
    y2_ref = glu_reference(x2, w1b, w2b, w3b)
    assert y2.shape == (batch2, seq2, dim2)
    assert jnp.allclose(y2, y2_ref, atol=5e-3, rtol=5e-2), "medium-case mismatch"

    print("KERNEL_OK")
</pallas_src>

<mosaic_0001>
module attributes {stable_mosaic.version = 11 : i64} {
  func.func @_glu_kernel(%arg0: i32, %arg1: i32, %arg2: memref<16x128xbf16, #tpu.memory_space<vmem>>, %arg3: memref<128x256xbf16, #tpu.memory_space<vmem>>, %arg4: memref<128x128xbf16, #tpu.memory_space<vmem>>, %arg5: memref<16x128xf32, #tpu.memory_space<vmem>>, %arg6: memref<16x128xf32, #tpu.memory_space<vmem>>) attributes {dimension_semantics = [#tpu.dimension_semantics<parallel>, #tpu.dimension_semantics<arbitrary>], iteration_bounds = array<i64: 1, 1>, scalar_prefetch = 0 : i64, scratch_operands = 1 : i64, tpu.core_type = #tpu.core_type<tc>, window_params = [{pipeline_mode = #tpu.pipeline_mode<synchronous>, transform_indices = @transform_0, window_bounds = array<i64: 16, 128>}, {transform_indices = @transform_1, window_bounds = array<i64: 128, 256>}, {transform_indices = @transform_2, window_bounds = array<i64: 128, 128>}, {pipeline_mode = #tpu.pipeline_mode<synchronous>, transform_indices = @transform_3, window_bounds = array<i64: 16, 128>}]} {
    %c0 = arith.constant 0 : index
    %c0_0 = arith.constant 0 : index
    %0 = vector.load %arg2[%c0, %c0_0] : memref<16x128xbf16, #tpu.memory_space<vmem>>, vector<16x128xbf16>
    %c0_1 = arith.constant 0 : index
    %c0_2 = arith.constant 0 : index
    %1 = vector.load %arg3[%c0_1, %c0_2] : memref<128x256xbf16, #tpu.memory_space<vmem>>, vector<128x256xbf16>
    %cst = arith.constant dense<0.000000e+00> : vector<16x256xf32>
    %2 = tpu.matmul %0, %1, %cst {dimension_numbers = #tpu.dot_dimension_numbers<[1], [0], [0], [1], [0, 0, 1, 1], [], []>} : vector<16x128xbf16>, vector<128x256xbf16>, vector<16x256xf32> -> vector<16x256xf32>
    %3 = vector.extract_strided_slice %2 {offsets = [0, 0], sizes = [16, 128], strides = [1, 1]} : vector<16x256xf32> to vector<16x128xf32>
    %4 = arith.negf %3 : vector<16x128xf32>
    %5 = math.exp %4 : vector<16x128xf32>
    %cst_3 = arith.constant 1.000000e+00 : f32
    %6 = vector.broadcast %cst_3 : f32 to vector<16x128xf32>
    %7 = arith.addf %6, %5 : vector<16x128xf32>
    %8 = arith.divf %6, %7 : vector<16x128xf32>
    %9 = vector.extract_strided_slice %2 {offsets = [0, 128], sizes = [16, 128], strides = [1, 1]} : vector<16x256xf32> to vector<16x128xf32>
    %10 = arith.mulf %8, %9 : vector<16x128xf32>
    %11 = arith.truncf %10 : vector<16x128xf32> to vector<16x128xbf16>
    %c0_4 = arith.constant 0 : index
    %c0_5 = arith.constant 0 : index
    %12 = vector.load %arg4[%c0_4, %c0_5] : memref<128x128xbf16, #tpu.memory_space<vmem>>, vector<128x128xbf16>
    %cst_6 = arith.constant dense<0.000000e+00> : vector<16x128xf32>
    %13 = tpu.matmul %11, %12, %cst_6 {dimension_numbers = #tpu.dot_dimension_numbers<[1], [0], [0], [1], [0, 0, 1, 1], [], []>} : vector<16x128xbf16>, vector<128x128xbf16>, vector<16x128xf32> -> vector<16x128xf32>
    %c0_i32 = arith.constant 0 : i32
    %14 = arith.cmpi eq, %arg1, %c0_i32 : i32
    %15 = arith.extui %14 : i1 to i32
    %c0_i32_7 = arith.constant 0 : i32
    %16 = arith.cmpi ne, %15, %c0_i32_7 : i32
    scf.if %16 {
      %c0_12 = arith.constant 0 : index
      %c0_13 = arith.constant 0 : index
      %23 = vector.load %arg6[%c0_12, %c0_13] : memref<16x128xf32, #tpu.memory_space<vmem>>, vector<16x128xf32>
      tpu.vector_store %arg6[%c0_12, %c0_13], %13 {strides = array<i32>} : memref<16x128xf32, #tpu.memory_space<vmem>>, vector<16x128xf32>,
    } else {
    }
    %c0_i32_8 = arith.constant 0 : i32
    %17 = arith.cmpi sgt, %arg1, %c0_i32_8 : i32
    %18 = arith.extui %17 : i1 to i32
    %c0_i32_9 = arith.constant 0 : i32
    %19 = arith.cmpi ne, %18, %c0_i32_9 : i32
    scf.if %19 {
      %c0_12 = arith.constant 0 : index
      %c0_13 = arith.constant 0 : index
      %23 = vector.load %arg6[%c0_12, %c0_13] : memref<16x128xf32, #tpu.memory_space<vmem>>, vector<16x128xf32>
      %24 = arith.addf %23, %13 : vector<16x128xf32>
      %c0_14 = arith.constant 0 : index
      %c0_15 = arith.constant 0 : index
      %25 = vector.load %arg6[%c0_14, %c0_15] : memref<16x128xf32, #tpu.memory_space<vmem>>, vector<16x128xf32>
      tpu.vector_store %arg6[%c0_14, %c0_15], %24 {strides = array<i32>} : memref<16x128xf32, #tpu.memory_space<vmem>>, vector<16x128xf32>,
    } else {
    }
    %c0_i32_10 = arith.constant 0 : i32
    %20 = arith.cmpi eq, %arg1, %c0_i32_10 : i32
    %21 = arith.extui %20 : i1 to i32
    %c0_i32_11 = arith.constant 0 : i32
    %22 = arith.cmpi ne, %21, %c0_i32_11 : i32
    scf.if %22 {
      %c0_12 = arith.constant 0 : index
      %c0_13 = arith.constant 0 : index
      %23 = vector.load %arg6[%c0_12, %c0_13] : memref<16x128xf32, #tpu.memory_space<vmem>>, vector<16x128xf32>
      %c0_14 = arith.constant 0 : index
      %c0_15 = arith.constant 0 : index
      %24 = vector.load %arg5[%c0_14, %c0_15] : memref<16x128xf32, #tpu.memory_space<vmem>>, vector<16x128xf32>
      tpu.vector_store %arg5[%c0_14, %c0_15], %23 {strides = array<i32>} : memref<16x128xf32, #tpu.memory_space<vmem>>, vector<16x128xf32>,
    } else {
    }
    return
  }
  func.func @transform_0(%arg0: i32, %arg1: i32) -> (i32, i32) {
    %c0_i32 = arith.constant 0 : i32
    %c0_i32_0 = arith.constant 0 : i32
    return %arg0, %c0_i32 : i32, i32
  }
  func.func @transform_1(%arg0: i32, %arg1: i32) -> (i32, i32) {
    %c0_i32 = arith.constant 0 : i32
    %c0_i32_0 = arith.constant 0 : i32
    return %c0_i32, %arg1 : i32, i32
  }
  func.func @transform_2(%arg0: i32, %arg1: i32) -> (i32, i32) {
    %c0_i32 = arith.constant 0 : i32
    %c0_i32_0 = arith.constant 0 : i32
    return %arg1, %c0_i32 : i32, i32
  }
  func.func @transform_3(%arg0: i32, %arg1: i32) -> (i32, i32) {
    %c0_i32 = arith.constant 0 : i32
    %c0_i32_0 = arith.constant 0 : i32
    return %arg0, %c0_i32 : i32, i32
  }
}

</mosaic_0001>

<llo_original>
// kernel: glu_forward_packed.1
$region0: #{glu_forward_packed.1}
  #allocation0 [shape = 'u32[]', space=smem, size = 0x4, offset = 0x4, fixed_abs, tag = 'smem constant byte address 0x4 - core index']
  #allocation1 [shape = 'u32[144,128]{1,0:T(1,128)}', space=vmem, size = 0x12000, scoped, tag = 'internal scratch']
  #allocation2 [shape = 'f32[16,128]{1,0:T(8,128)}', space=vmem, size = 0x2000, scoped, tag = 'scratch operand']
  %s0 = inlined_call_operand.vmem [shape: bf16[16,128], index: 0, kind: input, shape index: {}]
  %s1 = inlined_call_operand.hbm [shape: bf16[128,256], index: 1, kind: input, shape index: {}]
  %s2 = inlined_call_operand.hbm [shape: bf16[128,128], index: 2, kind: input, shape index: {}]
  %s3 = inlined_call_operand.vmem [shape: f32[16,128], index: 3, kind: output, shape index: {}]
  %s4 = sld [smem:[#allocation0]]
  $region42: #{glu_forward_packed.1} parent=0
    _
  %s6 = ssub.s32 1, %s4
  %s7 = scalar_select 0, %s6, %s4
  $region1: #{glu_forward_packed.1} parent=0
    #allocation3 [shape = 'u8[65536]{0}', space=vmem, size = 0x10000, scoped, tag = 'input window, operand 1, single buffered']
    #allocation4 [shape = 's32[1]{0}', space=sflag, size = 0x4, scoped, tag = 'scoped memory for glu_forward_packed.1']
    #allocation5 [shape = 'u8[32768]{0}', space=vmem, size = 0x8000, scoped, tag = 'input window, operand 2, single buffered']
    #allocation6 [shape = 's32[1]{0}', space=sflag, size = 0x4, scoped, tag = 'scoped memory for glu_forward_packed.1']
    %8 = vsyncpa [#allocation4], 0
    %9 = vsyncpa [#allocation6], 0
    // Predicated region
    $region2: #{glu_forward_packed.1} parent=1 // pred_check
      _
    $region3: #{glu_forward_packed.1} parent=1 // pred_check_branch
      %11 = sbr.rel (0) target = $region5
    $region4: #{glu_forward_packed.1} parent=1 // pred_region
      _
    $region5: #{glu_forward_packed.1} parent=1 // pred_fallthru
      _
    // Predicated region
    $region6: #{glu_forward_packed.1} parent=1 // pred_check
      _
    $region7: #{glu_forward_packed.1} parent=1 // pred_check_branch
      %13 = sbr.rel (0) target = $region9
    $region8: #{glu_forward_packed.1} parent=1 // pred_region
      %s15 = ssub.s32 2048, 2048
      %16 = vsyncadd [#allocation4], %s15
      %s17 = sshll.u32 [#allocation3], 4
      %s18 = int_to_ptr.vmem [resolvable:$true] %s17
      %23 = dma.hbm_to_vmem [thread:$0]  %s1, 2048, %s18, [#allocation4], 128, 128, 8
    $region9: #{glu_forward_packed.1} parent=1 // pred_fallthru
      _
    // Predicated region
    $region10: #{glu_forward_packed.1} parent=1 // pred_check
      _
    $region11: #{glu_forward_packed.1} parent=1 // pred_check_branch
      %25 = sbr.rel (0) target = $region13
    $region12: #{glu_forward_packed.1} parent=1 // pred_region
      %s27 = ssub.s32 1024, 1024
      %28 = vsyncadd [#allocation6], %s27
      %s29 = sshll.u32 [#allocation5], 4
      %s30 = int_to_ptr.vmem [resolvable:$true] %s29
      %35 = dma.hbm_to_vmem [thread:$0]  %s2, 1024, %s30, [#allocation6], 64, 64, 4
    $region13: #{glu_forward_packed.1} parent=1 // pred_fallthru
      _
    // Predicated region
    $region14: #{glu_forward_packed.1} parent=1 // pred_check
      _
    $region15: #{glu_forward_packed.1} parent=1 // pred_check_branch
      %37 = sbr.rel (0) target = $region17
    $region16: #{glu_forward_packed.1} parent=1 // pred_region
      %38 = dma.done [#allocation4], 2048
    $region17: #{glu_forward_packed.1} parent=1 // pred_fallthru
      _
    // Predicated region
    $region18: #{glu_forward_packed.1} parent=1 // pred_check
      _
    $region19: #{glu_forward_packed.1} parent=1 // pred_check_branch
      %40 = sbr.rel (0) target = $region21
    $region20: #{glu_forward_packed.1} parent=1 // pred_region
      %41 = dma.done [#allocation6], 1024
    $region21: #{glu_forward_packed.1} parent=1 // pred_fallthru
      _
    %v43 = vld [vmem:[%s0] sm:$0xf]
    %v44 = vld [vmem:[%s0 + $0x4] sm:$0xf]
    %v45 = vld [vmem:[#allocation3] sm:$0xff]
    %v46 = vld [vmem:[#allocation3 + $0x8] sm:$0xff]
    %v47 = vld [vmem:[#allocation3 + $0x10] sm:$0xff]
    %v48 = vld [vmem:[#allocation3 + $0x18] sm:$0xff]
    %v49 = vld [vmem:[#allocation3 + $0x20] sm:$0xff]
    %v50 = vld [vmem:[#allocation3 + $0x28] sm:$0xff]
    %v51 = vld [vmem:[#allocation3 + $0x30] sm:$0xff]
    %v52 = vld [vmem:[#allocation3 + $0x38] sm:$0xff]
    %v53 = vld [vmem:[#allocation3 + $0x40] sm:$0xff]
    %v54 = vld [vmem:[#allocation3 + $0x48] sm:$0xff]
    %v55 = vld [vmem:[#allocation3 + $0x50] sm:$0xff]
    %v56 = vld [vmem:[#allocation3 + $0x58] sm:$0xff]
    %v57 = vld [vmem:[#allocation3 + $0x60] sm:$0xff]
    %v58 = vld [vmem:[#allocation3 + $0x68] sm:$0xff]
    %v59 = vld [vmem:[#allocation3 + $0x70] sm:$0xff]
    %v60 = vld [vmem:[#allocation3 + $0x78] sm:$0xff]
    %v63 = vunpack.c.l.b16 %v43
    %v64 = vunpack.c.l.b16 %v44
    %v65 = vpack.c.b16 %v64, %v63
    %v83 = vunpack.c.l.b16 %v45
    %v84 = vunpack.c.h.b16 %v45
    %v85 = vunpack.c.l.b16 %v46
    %v86 = vunpack.c.h.b16 %v46
    %v87 = vunpack.c.l.b16 %v47
    %v88 = vunpack.c.h.b16 %v47
    %v89 = vunpack.c.l.b16 %v48
    %v90 = vunpack.c.h.b16 %v48
    %v91 = vunpack.c.l.b16 %v49
    %v92 = vunpack.c.h.b16 %v49
    %v93 = vunpack.c.l.b16 %v50
    %v94 = vunpack.c.h.b16 %v50
    %v95 = vunpack.c.l.b16 %v51
    %v96 = vunpack.c.h.b16 %v51
    %v97 = vunpack.c.l.b16 %v52
    %v98 = vunpack.c.h.b16 %v52
    %v99 = vunpack.c.l.b16 %v53
    %v100 = vunpack.c.h.b16 %v53
    %v101 = vunpack.c.l.b16 %v54
    %v102 = vunpack.c.h.b16 %v54
    %v103 = vunpack.c.l.b16 %v55
    %v104 = vunpack.c.h.b16 %v55
    %v105 = vunpack.c.l.b16 %v56
    %v106 = vunpack.c.h.b16 %v56
    %v107 = vunpack.c.l.b16 %v57
    %v108 = vunpack.c.h.b16 %v57
    %v109 = vunpack.c.l.b16 %v58
    %v110 = vunpack.c.h.b16 %v58
    %v111 = vunpack.c.l.b16 %v59
    %v112 = vunpack.c.h.b16 %v59
    %v113 = vunpack.c.l.b16 %v60
    %v114 = vunpack.c.h.b16 %v60
    %v115 = vpack.c.b16 %v85, %v83
    %v116 = vpack.c.b16 %v86, %v84
    %v117 = vpack.c.b16 %v89, %v87
    %v118 = vpack.c.b16 %v90, %v88
    %v119 = vpack.c.b16 %v93, %v91
    %v120 = vpack.c.b16 %v94, %v92
    %v121 = vpack.c.b16 %v97, %v95
    %v122 = vpack.c.b16 %v98, %v96
    %v123 = vpack.c.b16 %v101, %v99
    %v124 = vpack.c.b16 %v102, %v100
    %v125 = vpack.c.b16 %v105, %v103
    %v126 = vpack.c.b16 %v106, %v104
    %v127 = vpack.c.b16 %v109, %v107
    %v128 = vpack.c.b16 %v110, %v108
    %v129 = vpack.c.b16 %v113, %v111
    %v130 = vpack.c.b16 %v114, %v112
    %147 = vmatprep.subr.bf16.mxu0 %v130
    %148 = vmatpush1.bf16.msra.mxu0 %v129
    %149 = vmatprep.subr.bf16.mxu0 %v128
    %150 = vmatpush1.bf16.msra.mxu0 %v127
    %151 = vmatprep.subr.bf16.mxu0 %v126
    %152 = vmatpush1.bf16.msra.mxu0 %v125
    %153 = vmatprep.subr.bf16.mxu0 %v124
    %154 = vmatpush1.bf16.msra.mxu0 %v123
    %155 = vmatprep.subr.bf16.mxu0 %v122
    %156 = vmatpush1.bf16.msra.mxu0 %v121
    %157 = vmatprep.subr.bf16.mxu0 %v120
    %158 = vmatpush1.bf16.msra.mxu0 %v119
    %159 = vmatprep.subr.bf16.mxu0 %v118
    %160 = vmatpush1.bf16.msra.mxu0 %v117
    %161 = vmatprep.subr.bf16.mxu0 %v116
    %162 = vmatpush1.bf16.msra.mxu0 %v115
    %163 = vmatprep.subr.bf16.mxu0 0
    %164 = vmatpush2.bf16.msra.mxu0 0
    %165 = vmatprep.subr.bf16.mxu0 0
    %166 = vmatpush2.bf16.msra.mxu0 0
    %167 = vmatprep.subr.bf16.mxu0 0
    %168 = vmatpush2.bf16.msra.mxu0 0
    %169 = vmatprep.subr.bf16.mxu0 0
    %170 = vmatpush2.bf16.msra.mxu0 0
    %171 = vmatprep.subr.bf16.mxu0 0
    %172 = vmatpush2.bf16.msra.mxu0 0
    %173 = vmatprep.subr.bf16.mxu0 0
    %174 = vmatpush2.bf16.msra.mxu0 0
    %175 = vmatprep.subr.bf16.mxu0 0
    %176 = vmatpush2.bf16.msra.mxu0 0
    %177 = vmatprep.subr.bf16.mxu0 0
    %178 = vmatpush2.bf16.msra.mxu0 0
    %179 = vmatprep.mubr.bf16.mxu0 0
    %180 = vmatmul.mubr.bf16.gmra.mxu0 %v65
    %v181 = vpop.f32.mrf.mxu0
    %v182 = vadd.f32 0.0, %v181
    %v183 = vpop.f32.mrf.mxu0
    %v184 = vadd.f32 0.0, %v183
    %v185 = vpop.f32.mrf.mxu0
    %v186 = vadd.f32 0.0, %v185
    %v187 = vpop.f32.mrf.mxu0
    %v188 = vadd.f32 0.0, %v187
    %189 = vdwg.mxu0
    %v190 = vxor.u32 %v182, 2147483648
    %v191 = vxor.u32 %v186, 2147483648
    %v192 = vmul.f32 %v190, 1.442695
    %v193 = vpow.pop %v192
    %v194 = vmul.f32 %v191, 1.442695
    %v195 = vpow.pop %v194
    %v196 = vadd.f32 %v193, 1.0
    %v197 = vadd.f32 %v195, 1.0
    %v198 = vrcp.pop %v196
    %v199 = vmul.f32 1.0, %v198
    %v200 = vrcp.pop %v197
    %v201 = vmul.f32 1.0, %v200
    %v202 = vmul.f32 %v199, %v184
    %v203 = vmul.f32 %v201, %v188
    %v204 = vpack.c.bf16 %v203, %v202
    %v205 = vld [vmem:[#allocation5] sm:$0xf]
    %v206 = vld [vmem:[#allocation5 + $0x4] sm:$0xf]
    %v207 = vld [vmem:[#allocation5 + $0x8] sm:$0xf]
    %v208 = vld [vmem:[#allocation5 + $0xc] sm:$0xf]
    %v209 = vld [vmem:[#allocation5 + $0x10] sm:$0xf]
    %v210 = vld [vmem:[#allocation5 + $0x14] sm:$0xf]
    %v211 = vld [vmem:[#allocation5 + $0x18] sm:$0xf]
    %v212 = vld [vmem:[#allocation5 + $0x1c] sm:$0xf]
    %v213 = vld [vmem:[#allocation5 + $0x20] sm:$0xf]
    %v214 = vld [vmem:[#allocation5 + $0x24] sm:$0xf]
    %v215 = vld [vmem:[#allocation5 + $0x28] sm:$0xf]
    %v216 = vld [vmem:[#allocation5 + $0x2c] sm:$0xf]
    %v217 = vld [vmem:[#allocation5 + $0x30] sm:$0xf]
    %v218 = vld [vmem:[#allocation5 + $0x34] sm:$0xf]
    %v219 = vld [vmem:[#allocation5 + $0x38] sm:$0xf]
    %v220 = vld [vmem:[#allocation5 + $0x3c] sm:$0xf]
    %v237 = vunpack.c.l.b16 %v205
    %v238 = vunpack.c.l.b16 %v206
    %v239 = vunpack.c.l.b16 %v207
    %v240 = vunpack.c.l.b16 %v208
    %v241 = vunpack.c.l.b16 %v209
    %v242 = vunpack.c.l.b16 %v210
    %v243 = vunpack.c.l.b16 %v211
    %v244 = vunpack.c.l.b16 %v212
    %v245 = vunpack.c.l.b16 %v213
    %v246 = vunpack.c.l.b16 %v214
    %v247 = vunpack.c.l.b16 %v215
    %v248 = vunpack.c.l.b16 %v216
    %v249 = vunpack.c.l.b16 %v217
    %v250 = vunpack.c.l.b16 %v218
    %v251 = vunpack.c.l.b16 %v219
    %v252 = vunpack.c.l.b16 %v220
    %v253 = vpack.c.b16 %v238, %v237
    %v254 = vpack.c.b16 %v240, %v239
    %v255 = vpack.c.b16 %v242, %v241
    %v256 = vpack.c.b16 %v244, %v243
    %v257 = vpack.c.b16 %v246, %v245
    %v258 = vpack.c.b16 %v248, %v247
    %v259 = vpack.c.b16 %v250, %v249
    %v260 = vpack.c.b16 %v252, %v251
    %269 = vmatprep.subr.bf16.mxu0 0
    %270 = vmatpush1.bf16.msra.mxu0 %v260
    %271 = vmatprep.subr.bf16.mxu0 0
    %272 = vmatpush1.bf16.msra.mxu0 %v259
    %273 = vmatprep.subr.bf16.mxu0 0
    %274 = vmatpush1.bf16.msra.mxu0 %v258
    %275 = vmatprep.subr.bf16.mxu0 0
    %276 = vmatpush1.bf16.msra.mxu0 %v257
    %277 = vmatprep.subr.bf16.mxu0 0
    %278 = vmatpush1.bf16.msra.mxu0 %v256
    %279 = vmatprep.subr.bf16.mxu0 0
    %280 = vmatpush1.bf16.msra.mxu0 %v255
    %281 = vmatprep.subr.bf16.mxu0 0
    %282 = vmatpush1.bf16.msra.mxu0 %v254
    %283 = vmatprep.subr.bf16.mxu0 0
    %284 = vmatpush1.bf16.msra.mxu0 %v253
    %285 = vmatprep.subr.bf16.mxu0 0
    %286 = vmatpush2.bf16.msra.mxu0 0
    %287 = vmatprep.subr.bf16.mxu0 0
    %288 = vmatpush2.bf16.msra.mxu0 0
    %289 = vmatprep.subr.bf16.mxu0 0
    %290 = vmatpush2.bf16.msra.mxu0 0
    %291 = vmatprep.subr.bf16.mxu0 0
    %292 = vmatpush2.bf16.msra.mxu0 0
    %293 = vmatprep.subr.bf16.mxu0 0
    %294 = vmatpush2.bf16.msra.mxu0 0
    %295 = vmatprep.subr.bf16.mxu0 0
    %296 = vmatpush2.bf16.msra.mxu0 0
    %297 = vmatprep.subr.bf16.mxu0 0
    %298 = vmatpush2.bf16.msra.mxu0 0
    %299 = vmatprep.subr.bf16.mxu0 0
    %300 = vmatpush2.bf16.msra.mxu0 0
    %301 = vmatprep.mubr.bf16.mxu0 0
    %302 = vmatmul.mubr.bf16.gmra.mxu0 %v204
    %v303 = vpop.f32.mrf.mxu0
    %v304 = vadd.f32 0.0, %v303
    %v305 = vpop.f32.mrf.mxu0
    %v306 = vpop.f32.mrf.mxu0
    %v307 = vadd.f32 0.0, %v306
    %v308 = vpop.f32.mrf.mxu0
    %309 = vdwg.mxu0
    %p310 = scmp.eq.s32.totalorder 0, 0
    // Predicated region
    $region22: #{glu_forward_packed.1} parent=1 // pred_check
      %p311 = pneg %p310
    $region23: #{glu_forward_packed.1} parent=1 // pred_check_branch
      %313 = sbr.rel (%p311) target = $region25
    $region24: #{glu_forward_packed.1} parent=1 // pred_region
      %314 = vst [vmem:[#allocation2] sm:$0xff] %v304
      %315 = vst [vmem:[#allocation2 + $0x8] sm:$0xff] %v307
    $region25: #{glu_forward_packed.1} parent=1 // pred_fallthru
      _
    %p316 = scmp.gt.s32.totalorder 0, 0
    // Predicated region
    $region26: #{glu_forward_packed.1} parent=1 // pred_check
      %p317 = pneg %p316
    $region27: #{glu_forward_packed.1} parent=1 // pred_check_branch
      %319 = sbr.rel (%p317) target = $region29
    $region28: #{glu_forward_packed.1} parent=1 // pred_region
      %v320 = vld [vmem:[#allocation2] sm:$0xff]
      %v321 = vld [vmem:[#allocation2 + $0x8] sm:$0xff]
      %v322 = vadd.f32 %v320, %v304
      %v323 = vadd.f32 %v321, %v307
      %324 = vst [vmem:[#allocation2] sm:$0xff] %v322
      %325 = vst [vmem:[#allocation2 + $0x8] sm:$0xff] %v323
    $region29: #{glu_forward_packed.1} parent=1 // pred_fallthru
      _
    // Predicated region
    $region30: #{glu_forward_packed.1} parent=1 // pred_check
      %p326 = pneg %p310
    $region31: #{glu_forward_packed.1} parent=1 // pred_check_branch
      %328 = sbr.rel (%p326) target = $region33
    $region32: #{glu_forward_packed.1} parent=1 // pred_region
      %v329 = vld [vmem:[#allocation2] sm:$0xff]
      %v330 = vld [vmem:[#allocation2 + $0x8] sm:$0xff]
      %331 = vst [vmem:[%s3] sm:$0xff] %v329
      %332 = vst [vmem:[%s3 + $0x8] sm:$0xff] %v330
    $region33: #{glu_forward_packed.1} parent=1 // pred_fallthru
      _
    // Predicated region
    $region34: #{glu_forward_packed.1} parent=1 // pred_check
      _
    $region35: #{glu_forward_packed.1} parent=1 // pred_check_branch
      %334 = sbr.rel (0) target = $region37
    $region36: #{glu_forward_packed.1} parent=1 // pred_region
      _
    $region37: #{glu_forward_packed.1} parent=1 // pred_fallthru
      _
    // Predicated region
    $region38: #{glu_forward_packed.1} parent=1 // pred_check
      _
    $region39: #{glu_forward_packed.1} parent=1 // pred_check_branch
      %336 = sbr.rel (0) target = $region41
    $region40: #{glu_forward_packed.1} parent=1 // pred_region
      _
    $region41: #{glu_forward_packed.1} parent=1 // pred_fallthru
      _
    %337 = vsyncpa [#allocation4], 1
    %338 = vsyncpa [#allocation6], 1

</llo_original>
